<compile_context>
chip_gen: v7x
topology: tpu7x:2x2x1
jax: 0.10.0
libtpu: 0.0.40
codegen_flags: <defaults>
</compile_context>

<pallas_src>
import math
import functools

import jax
import jax.numpy as jnp
from jax.experimental import pallas as pl
from jax.experimental.pallas import tpu as pltpu

F32 = jnp.float32
BF16 = jnp.bfloat16
NEG_INF = -1e30          # finite stand-in for the -inf key-padding mask
EPS = 1e-5

_VMEM_LIMIT = None


def _vmem_limit_bytes():
    """Scoped-VMEM cap per generation: 48 MiB on v7x (64 MiB/TC), 64 MiB on v5e/v6e."""
    global _VMEM_LIMIT
    if _VMEM_LIMIT is None:
        phys = None
        try:
            phys = int(pltpu.get_tpu_info().vmem_capacity_bytes)
        except Exception:
            phys = None
        if phys is None:
            _VMEM_LIMIT = 32 * 1024 * 1024           # conservative fallback
        elif phys <= 64 * 1024 * 1024:
            _VMEM_LIMIT = 48 * 1024 * 1024           # v7x
        else:
            _VMEM_LIMIT = 64 * 1024 * 1024           # v5e / v6e
    return _VMEM_LIMIT


def _cparams(n_grid):
    return pltpu.CompilerParams(
        dimension_semantics=("parallel",) * n_grid,
        vmem_limit_bytes=_vmem_limit_bytes())


# ---------------------------------------------------------------------------
# in-kernel math helpers
# ---------------------------------------------------------------------------
def _gelu(x):
    # TODO(synk): PyTorch default GELU is erf-exact; tanh approximation used here (EUP path).
    c = math.sqrt(2.0 / math.pi)
    return 0.5 * x * (1.0 + jnp.tanh(c * (x + 0.044715 * x * x * x)))


def _rms(x, gamma, eps=EPS):
    ms = jnp.mean(x * x, axis=-1, keepdims=True)
    return x * jax.lax.rsqrt(ms + eps) * gamma


def _pick_tile(m, cands=(512, 256, 128, 64, 32, 16, 8)):
    for c in cands:
        if m % c == 0:
            return c
    return m


# ---------------------------------------------------------------------------
# 1. Conv1d + RMSNorm(norm3)   (k shifted matmuls, lane-dense output)
# ---------------------------------------------------------------------------
def _conv1d_rms_kernel(x_ref, w_ref, b_ref, g_ref, o_ref, *, k):
    Lpad, D = x_ref.shape
    Lv = Lpad - (k - 1)
    x = x_ref[...]                                             # (Lpad, D) f32
    y = b_ref[...]
    for j in range(k):                                         # static tap loop
        y = y + jnp.dot(x[j:j + Lv, :].astype(BF16), w_ref[j],
                        preferred_element_type=F32)
    o_ref[pl.ds(0, Lv), :] = _rms(y, g_ref[...])
    if k > 1:
        # rows >= Lv only exist because of lane-dense padding; keep them finite.
        o_ref[pl.ds(Lv, k - 1), :] = jnp.zeros((k - 1, D), F32)


def conv1d_rms(x, w_taps, b, gamma):
    B, Lp, D = x.shape
    k = w_taps.shape[0]
    return pl.pallas_call(
        functools.partial(_conv1d_rms_kernel, k=k),
        grid=(B,),
        in_specs=[
            pl.BlockSpec((None, Lp, D), lambda b_: (b_, 0, 0)),
            pl.BlockSpec((k, D, D), lambda b_: (0, 0, 0)),
            pl.BlockSpec((1, D), lambda b_: (0, 0)),
            pl.BlockSpec((1, D), lambda b_: (0, 0)),
        ],
        out_specs=pl.BlockSpec((None, Lp, D), lambda b_: (b_, 0, 0)),
        out_shape=jax.ShapeDtypeStruct((B, Lp, D), F32),
        compiler_params=_cparams(1),
    )(x, w_taps, b, gamma)


# ---------------------------------------------------------------------------
# 2. Conv2d(1ch) + BatchNorm(eval, folded) + GELU  (lane shift once per column tap)
# ---------------------------------------------------------------------------
def _conv2d_gelu_kernel(x_ref, w_ref, sb_ref, o_ref, *, k, lp_valid):
    L = x_ref.shape[0]
    Lv = L - (k - 1)
    x = x_ref[...]                                             # (L, L) f32
    acc = jnp.zeros((Lv, L), F32)
    for q in range(k):
        # one cross-lane shift per column tap, reused across all row taps
        xq = x if q == 0 else pltpu.roll(x, L - q, axis=1)
        for p in range(k):
            acc = acc + xq[p:p + Lv, :] * w_ref[p * k + q]
    y = _gelu(acc * sb_ref[0] + sb_ref[1])                     # folded conv-bias + BN(eval)
    # zero everything beyond the true reduced length (required by conv2d_t; padded
    # key columns are additionally masked in the attention kernel)
    ri = jax.lax.broadcasted_iota(jnp.int32, (Lv, L), 0)
    ci = jax.lax.broadcasted_iota(jnp.int32, (Lv, L), 1)
    keep = jnp.logical_and(ri < lp_valid, ci < lp_valid)
    o_ref[pl.ds(0, Lv), :] = jnp.where(keep, y, 0.0).astype(o_ref.dtype)
    if k > 1:
        o_ref[pl.ds(Lv, k - 1), :] = jnp.zeros((k - 1, L), o_ref.dtype)


def conv2d_gelu(x, w_flat, sb, k, lp_valid):
    B, L, _ = x.shape
    return pl.pallas_call(
        functools.partial(_conv2d_gelu_kernel, k=k, lp_valid=lp_valid),
        grid=(B,),
        in_specs=[
            pl.BlockSpec((None, L, L), lambda b_: (b_, 0, 0)),
            pl.BlockSpec(memory_space=pltpu.MemorySpace.SMEM),
            pl.BlockSpec(memory_space=pltpu.MemorySpace.SMEM),
        ],
        out_specs=pl.BlockSpec((None, L, L), lambda b_: (b_, 0, 0)),
        out_shape=jax.ShapeDtypeStruct((B, L, L), BF16),       # pair tensor stored bf16 in HBM
        compiler_params=_cparams(1),
    )(x, w_flat, sb)


# ---------------------------------------------------------------------------
# 3. Fused MHA: QKV proj + in-kernel (pair-bias | ALiBi | key-padding) + softmax
#    + per-head (P@V)@Wo accumulation (no head concat) + padded-query zeroing.
# ---------------------------------------------------------------------------
def _mha_kernel(x_ref, bc_ref, kpm_ref, wqkv_ref, bqkv_ref, wo_ref, bo_ref,
                o_ref, *, nhead, slopes, lp_valid):
    Lp, D = x_ref.shape
    Dh = D // nhead
    H2 = nhead // 2

    x = x_ref[...].astype(BF16)
    qkv = jnp.dot(x, wqkv_ref[...], preferred_element_type=F32) + bqkv_ref[...]
    qkv = qkv.astype(BF16)                                     # single hoisted cast

    kpm = kpm_ref[...]                                         # (1, Lp), 0 / NEG_INF
    bc_kpm = bc_ref[...].astype(F32) + kpm                     # pair bias + padding, once

    row = jax.lax.broadcasted_iota(jnp.int32, (Lp, Lp), 0)
    col = jax.lax.broadcasted_iota(jnp.int32, (Lp, Lp), 1)
    rel = -jnp.abs(col - row).astype(F32)
    rel = jnp.where(kpm > -1.0, rel, NEG_INF)                  # padding folded into ALiBi base once

    o_acc = jnp.zeros((Lp, D), F32)
    for h in range(nhead):                                     # static head loop
        q = qkv[:, h * Dh:(h + 1) * Dh]                        # 1/sqrt(Dh) folded into wqkv
        kk = qkv[:, D + h * Dh:D + (h + 1) * Dh]
        v = qkv[:, 2 * D + h * Dh:2 * D + (h + 1) * Dh]
        s = jax.lax.dot_general(q, kk, (((1,), (1,)), ((), ())),
                                preferred_element_type=F32)
        s = s + (bc_kpm if h < H2 else rel * slopes[h - H2])
        s = s - jnp.max(s, axis=-1, keepdims=True)
        e = jnp.exp(s)
        pr = e * pl.reciprocal(jnp.sum(e, axis=-1, keepdims=True), approx=True)
        pv = jnp.dot(pr.astype(BF16), v, preferred_element_type=F32)      # (Lp, Dh)
        # per-head accumulation into the out-projection (avoids a cross-lane head concat)
        o_acc = o_acc + jnp.dot(pv.astype(BF16), wo_ref[h * Dh:(h + 1) * Dh, :],
                                preferred_element_type=F32)

    # zero query rows that only exist due to lane-dense padding (keeps conv1d_t exact)
    valid_q = jax.lax.broadcasted_iota(jnp.int32, (Lp, 1), 0) < lp_valid
    o_ref[...] = jnp.where(valid_q, o_acc + bo_ref[...], 0.0)


def fused_mha(xc, bc, kpm_add, p, nhead, slopes, lp_valid):
    B, Lp, D = xc.shape
    return pl.pallas_call(
        functools.partial(_mha_kernel, nhead=nhead, slopes=tuple(slopes),
                          lp_valid=lp_valid),
        grid=(B,),
        in_specs=[
            pl.BlockSpec((None, Lp, D), lambda b_: (b_, 0, 0)),
            pl.BlockSpec((None, Lp, Lp), lambda b_: (b_, 0, 0)),
            pl.BlockSpec((None, 1, Lp), lambda b_: (b_, 0, 0)),
            pl.BlockSpec((D, 3 * D), lambda b_: (0, 0)),
            pl.BlockSpec((1, 3 * D), lambda b_: (0, 0)),
            pl.BlockSpec((D, D), lambda b_: (0, 0)),
            pl.BlockSpec((1, D), lambda b_: (0, 0)),
        ],
        out_specs=pl.BlockSpec((None, Lp, D), lambda b_: (b_, 0, 0)),
        out_shape=jax.ShapeDtypeStruct((B, Lp, D), F32),
        compiler_params=_cparams(1),
    )(xc, bc, kpm_add, p['wqkv'], p['bqkv'], p['wo'], p['bo'])


# ---------------------------------------------------------------------------
# 4. ConvTranspose1d + RMSNorm(norm4) + GELU + residual + RMSNorm(norm1)
# ---------------------------------------------------------------------------
def _convt1d_fused_kernel(a_ref, r_ref, w_ref, b_ref, g4_ref, g1_ref,
                          o_ref, pad_ref, *, k):
    Lpad, D = a_ref.shape
    if k > 1:
        pad_ref[pl.ds(0, k - 1), :] = jnp.zeros((k - 1, D), F32)   # tiny border only
    pad_ref[pl.ds(k - 1, Lpad), :] = a_ref[...]
    y = b_ref[...]
    for j in range(k):                                          # flipped taps precomputed
        y = y + jnp.dot(pad_ref[pl.ds(j, Lpad), :].astype(BF16), w_ref[j],
                        preferred_element_type=F32)
    y = _gelu(_rms(y, g4_ref[...]))                             # gelu(norm4(convT(att)))
    o_ref[...] = _rms(r_ref[...] + y, g1_ref[...])              # norm1(x + x_att)


def convt1d_res_rms(a, res, w_taps, b, g4, g1):
    B, Lp, D = a.shape
    k = w_taps.shape[0]
    return pl.pallas_call(
        functools.partial(_convt1d_fused_kernel, k=k),
        grid=(B,),
        in_specs=[
            pl.BlockSpec((None, Lp, D), lambda b_: (b_, 0, 0)),
            pl.BlockSpec((None, Lp, D), lambda b_: (b_, 0, 0)),
            pl.BlockSpec((k, D, D), lambda b_: (0, 0, 0)),
            pl.BlockSpec((1, D), lambda b_: (0, 0)),
            pl.BlockSpec((1, D), lambda b_: (0, 0)),
            pl.BlockSpec((1, D), lambda b_: (0, 0)),
        ],
        out_specs=pl.BlockSpec((None, Lp, D), lambda b_: (b_, 0, 0)),
        out_shape=jax.ShapeDtypeStruct((B, Lp, D), F32),
        scratch_shapes=[pltpu.VMEM((Lp + k - 1, D), F32)],
        input_output_aliases={1: 0},                            # residual reused in place
        compiler_params=_cparams(1),
    )(a, res, w_taps, b, g4, g1)


# ---------------------------------------------------------------------------
# 5. SwiGLU FFN + residual + RMSNorm(norm2)  (row-tiled, resident weights)
# ---------------------------------------------------------------------------
def _ffn_res_rms_kernel(x_ref, w1_ref, b1_ref, w2_ref, b2_ref, g_ref, o_ref):
    x = x_ref[...]                                              # (tm, D) f32
    h = jnp.dot(x.astype(BF16), w1_ref[...],
                preferred_element_type=F32) + b1_ref[...]
    dff = h.shape[-1] // 2
    xp = h[:, :dff]
    gate = h[:, dff:]
    act = xp * gate * pl.reciprocal(1.0 + jnp.exp(-gate), approx=True)  # silu(gate)*x
    ff = jnp.dot(act.astype(BF16), w2_ref[...],
                 preferred_element_type=F32) + b2_ref[...]
    o_ref[...] = _rms(x + ff, g_ref[...])


def ffn_res_rms(x, w1, b1, w2, b2, gamma):
    B, L, D = x.shape
    M = B * L                                   # L is 128-aligned => tm >= 128 always
    tm = _pick_tile(M)
    dff2 = w1.shape[1]
    out = pl.pallas_call(
        _ffn_res_rms_kernel,
        grid=(M // tm,),
        in_specs=[
            pl.BlockSpec((tm, D), lambda i: (i, 0)),
            pl.BlockSpec((D, dff2), lambda i: (0, 0)),
            pl.BlockSpec((1, dff2), lambda i: (0, 0)),
            pl.BlockSpec((dff2 // 2, D), lambda i: (0, 0)),
            pl.BlockSpec((1, D), lambda i: (0, 0)),
            pl.BlockSpec((1, D), lambda i: (0, 0)),
        ],
        out_specs=pl.BlockSpec((tm, D), lambda i: (i, 0)),
        out_shape=jax.ShapeDtypeStruct((M, D), F32),
        compiler_params=_cparams(1),
    )(x.reshape(M, D), w1, b1, w2, b2, gamma)
    return out.reshape(B, L, D)


# ---------------------------------------------------------------------------
# 6. ConvTranspose2d(1ch) + BN(eval, folded) + GELU + pair-bias residual add
# ---------------------------------------------------------------------------
def _convt2d_gelu_add_kernel(x_ref, r_ref, w_ref, sb_ref, o_ref, pad_ref, *, k):
    L = x_ref.shape[0]
    bc = x_ref[...].astype(F32)                                 # bf16 -> f32 once
    if k > 1:
        pad_ref[pl.ds(0, k - 1), :] = jnp.zeros((k - 1, L), F32)   # tiny top border only
    acc = jnp.zeros((L, L), F32)
    for t2 in range(k):
        # one cross-lane shift per column tap; wrapped columns hit the zeroed pair border
        xq = bc if t2 == 0 else pltpu.roll(bc, t2, axis=1)
        pad_ref[pl.ds(k - 1, L), :] = xq
        for t1 in range(k):
            acc = acc + pad_ref[pl.ds(k - 1 - t1, L), :] * w_ref[t1 * k + t2]
    y = _gelu(acc * sb_ref[0] + sb_ref[1])                      # folded convT-bias + BN(eval)
    o_ref[...] = r_ref[...] + y                                 # bias + bias_att fused


def convt2d_gelu_add(x, res, w_flat, sb, k):
    B, L, _ = x.shape
    return pl.pallas_call(
        functools.partial(_convt2d_gelu_add_kernel, k=k),
        grid=(B,),
        in_specs=[
            pl.BlockSpec((None, L, L), lambda b_: (b_, 0, 0)),
            pl.BlockSpec((None, L, L), lambda b_: (b_, 0, 0)),
            pl.BlockSpec(memory_space=pltpu.MemorySpace.SMEM),
            pl.BlockSpec(memory_space=pltpu.MemorySpace.SMEM),
        ],
        out_specs=pl.BlockSpec((None, L, L), lambda b_: (b_, 0, 0)),
        out_shape=jax.ShapeDtypeStruct((B, L, L), F32),
        scratch_shapes=[pltpu.VMEM((L + k - 1, L), F32)],
        input_output_aliases={1: 0},                            # bias residual reused in place
        compiler_params=_cparams(1),
    )(x, res, w_flat, sb)


# ---------------------------------------------------------------------------
# model glue
# ---------------------------------------------------------------------------
def get_slopes(n):
    def get_slopes_power_of_2(n):
        start = 2 ** (-2 ** (-(math.log2(n) - 3)))
        ratio = start
        return [start * ratio ** i for i in range(n)]
    if math.log2(n).is_integer():
        return get_slopes_power_of_2(n)
    closest = 2 ** math.floor(math.log2(n))
    return get_slopes_power_of_2(closest) + get_slopes(2 * closest)[0::2][: n - closest]


def prepare_layer_params(raw_layers, depth, kernel_size, nhead):
    """One-time prep: bf16 matmul weights, tap-major conv stacks, folded BN, folded Q-scale."""
    prepared = []
    for i, p in enumerate(raw_layers):
        k = kernel_size if i < depth - 1 else 1
        dim = p['norm1_w'].shape[0]
        scale = 1.0 / math.sqrt(dim // nhead)
        wqkv = p['in_proj_w'].astype(F32).at[:, :dim].multiply(scale)   # fold 1/sqrt(Dh) into Q
        bqkv = p['in_proj_b'].astype(F32).at[:dim].multiply(scale)

        def bn_fold(conv_b, g, b, rm, rv):
            s = g / jnp.sqrt(rv + 1e-5)
            t = (conv_b - rm) * s + b
            return jnp.concatenate([s.reshape(1), t.reshape(1)]).astype(F32)

        prepared.append(dict(
            k=k,
            c1_w=jnp.transpose(p['conv1d_w'], (2, 1, 0)).astype(BF16),           # (k, Din, Dout)
            c1_b=p['conv1d_b'].reshape(1, -1).astype(F32),
            c1t_w=jnp.transpose(p['conv1d_t_w'], (2, 0, 1))[::-1].astype(BF16),  # flipped taps
            c1t_b=p['conv1d_t_b'].reshape(1, -1).astype(F32),
            c2_w=p['conv2d_w'].reshape(-1).astype(F32),
            c2_sb=bn_fold(p['conv2d_b'].reshape(()), p['bn2_g'].reshape(()),
                          p['bn2_b'].reshape(()), p['bn2_rm'].reshape(()),
                          p['bn2_rv'].reshape(())),
            c2t_w=p['conv2d_t_w'].reshape(-1).astype(F32),
            c2t_sb=bn_fold(p['conv2d_t_b'].reshape(()), p['bn2t_g'].reshape(()),
                           p['bn2t_b'].reshape(()), p['bn2t_rm'].reshape(()),
                           p['bn2t_rv'].reshape(())),
            wqkv=wqkv.astype(BF16), bqkv=bqkv.reshape(1, -1).astype(F32),
            wo=p['out_proj_w'].astype(BF16), bo=p['out_proj_b'].reshape(1, -1).astype(F32),
            w1=p['lin1_w'].astype(BF16), b1=p['lin1_b'].reshape(1, -1).astype(F32),
            w2=p['lin2_w'].astype(BF16), b2=p['lin2_b'].reshape(1, -1).astype(F32),
            g1=p['norm1_w'].reshape(1, -1).astype(F32),
            g2=p['norm2_w'].reshape(1, -1).astype(F32),
            g3=p['norm3_w'].reshape(1, -1).astype(F32),
            g4=p['norm4_w'].reshape(1, -1).astype(F32),
        ))
    return prepared


def ribonanza_forward(params, x0, nhead, depth, kernel_size):
    mask = x0['mask']
    # dynamic Lmax truncation done host-side on concrete inputs (not jitted)
    Lmax = int(jnp.max(jnp.sum(mask, axis=-1)))
    mask = mask[:, :Lmax]
    seq = x0['seq'][:, :Lmax]

    # lane-dense working length: everything runs at a 128-multiple length; the tail is
    # handled through key-padding masking / zeroing, so valid outputs match the model.
    L_pad = max(128, ((Lmax + 127) // 128) * 128)
    pad_n = L_pad - Lmax

    x = jnp.take(params['emb'], seq, axis=0).astype(F32)            # embedding gather (glue)
    x = jnp.pad(x, ((0, 0), (0, pad_n), (0, 0)))
    bias_img = x0['bp_matrix'][:, :Lmax, :Lmax].astype(F32)
    bias_img = jnp.pad(bias_img, ((0, 0), (0, pad_n), (0, pad_n)))

    kpm_bool = jnp.logical_not(mask)                                 # (B, Lmax), True = padded
    slopes = get_slopes(nhead // 2)
    layers = prepare_layer_params(params['layers'], depth, kernel_size, nhead)

    kpm_cache = {}

    def kpm_add(lp_valid):
        # additive key-padding row at the reduced length, computed once per distinct Lp
        if lp_valid not in kpm_cache:
            idx = (jnp.arange(lp_valid, dtype=jnp.int32) * Lmax) // lp_valid   # nearest interp
            v = jnp.where(kpm_bool[:, idx], NEG_INF, 0.0).astype(F32)
            v = jnp.pad(v, ((0, 0), (0, L_pad - lp_valid)), constant_values=NEG_INF)
            kpm_cache[lp_valid] = v[:, None, :]                                # (B, 1, L_pad)
        return kpm_cache[lp_valid]

    for p in layers:
        k = p['k']
        lp_valid = Lmax - k + 1
        xc = conv1d_rms(x, p['c1_w'], p['c1_b'], p['g3'])                      # norm3(conv1d(x))
        bc = conv2d_gelu(bias_img, p['c2_w'], p['c2_sb'], k, lp_valid)         # gelu(bn(conv2d(bias)))
        a = fused_mha(xc, bc, kpm_add(lp_valid), p, nhead, slopes, lp_valid)   # MHA, mask in-kernel
        x = convt1d_res_rms(a, x, p['c1t_w'], p['c1t_b'], p['g4'], p['g1'])    # norm1(x + gelu(norm4(convT)))
        x = ffn_res_rms(x, p['w1'], p['b1'], p['w2'], p['b2'], p['g2'])        # norm2(x + SwiGLU FFN)
        bias_img = convt2d_gelu_add(bc, bias_img, p['c2t_w'], p['c2t_sb'], k)  # bias + gelu(bn(convT2d))

    # final D->2 projection: negligible FLOPs, left to XLA (per review).
    out = x @ params['proj_w'].astype(F32) + params['proj_b'].astype(F32)
    return out[:, :Lmax]


# ---------------------------------------------------------------------------
# deterministic synthetic parameter init (PyTorch tensor layouts, eval-mode BN stats)
# ---------------------------------------------------------------------------
def init_params(key, dim, depth, kernel_size):
    def nrm(k, shape, s=0.05):
        return jax.random.normal(k, shape, dtype=F32) * s

    keys = jax.random.split(key, depth + 2)
    layers = []
    for i in range(depth):
        k = kernel_size if i < depth - 1 else 1
        ks = jax.random.split(keys[i], 12)
        layers.append(dict(
            conv1d_w=nrm(ks[0], (dim, dim, k)),   conv1d_b=nrm(ks[1], (dim,)),
            conv1d_t_w=nrm(ks[2], (dim, dim, k)), conv1d_t_b=nrm(ks[3], (dim,)),
            conv2d_w=nrm(ks[4], (1, 1, k, k)),    conv2d_b=nrm(ks[5], (1,)),
            conv2d_t_w=nrm(ks[6], (1, 1, k, k)),  conv2d_t_b=nrm(ks[7], (1,)),
            bn2_g=jnp.ones((1,), F32),  bn2_b=jnp.zeros((1,), F32),
            bn2_rm=jnp.zeros((1,), F32), bn2_rv=jnp.ones((1,), F32),
            bn2t_g=jnp.ones((1,), F32), bn2t_b=jnp.zeros((1,), F32),
            bn2t_rm=jnp.zeros((1,), F32), bn2t_rv=jnp.ones((1,), F32),
            in_proj_w=nrm(ks[8], (dim, 3 * dim)), in_proj_b=jnp.zeros((3 * dim,), F32),
            out_proj_w=nrm(ks[9], (dim, dim)),    out_proj_b=jnp.zeros((dim,), F32),
            lin1_w=nrm(ks[10], (dim, 8 * dim)),   lin1_b=jnp.zeros((8 * dim,), F32),
            lin2_w=nrm(ks[11], (4 * dim, dim)),   lin2_b=jnp.zeros((dim,), F32),
            norm1_w=jnp.ones((dim,), F32), norm2_w=jnp.ones((dim,), F32),
            norm3_w=jnp.ones((dim,), F32), norm4_w=jnp.ones((dim,), F32),
        ))
    return dict(
        emb=nrm(keys[depth], (4, dim), s=1.0),
        layers=layers,
        proj_w=nrm(keys[depth + 1], (dim, 2)),
        proj_b=jnp.zeros((2,), F32),
    )


# ---------------------------------------------------------------------------
if __name__ == "__main__":
    B, L = 2, 16
    dim, depth, head_size, kernel_size = 32, 2, 8, 3
    nhead = dim // head_size                      # 4 heads (must be even)

    root = jax.random.PRNGKey(0)
    k_seq, k_bp, k_par = jax.random.split(root, 3)
    seq = jax.random.randint(k_seq, (B, L), 0, 4, dtype=jnp.int32)
    bp = jax.random.uniform(k_bp, (B, L, L), dtype=F32)
    bp = 0.5 * (bp + jnp.transpose(bp, (0, 2, 1)))
    mask = jnp.concatenate(
        [jnp.ones((1, L), dtype=bool),
         jnp.concatenate([jnp.ones((1, L - 2), dtype=bool),
                          jnp.zeros((1, 2), dtype=bool)], axis=1)], axis=0)

    params = init_params(k_par, dim, depth, kernel_size)
    out = ribonanza_forward(params, {'seq': seq, 'mask': mask, 'bp_matrix': bp},
                            nhead, depth, kernel_size)
    out = jax.block_until_ready(out)
    assert out.shape == (B, L, 2), out.shape
    assert bool(jnp.all(jnp.isfinite(out)))
    print("KERNEL_OK")
</pallas_src>

<mosaic_0001>
module attributes {stable_mosaic.version = 11 : i64} {
  func.func @_conv1d_rms_kernel(%arg0: i32, %arg1: memref<1x128x32xf32, #tpu.memory_space<vmem>>, %arg2: memref<3x32x32xbf16, #tpu.memory_space<vmem>>, %arg3: memref<1x32xf32, #tpu.memory_space<vmem>>, %arg4: memref<1x32xf32, #tpu.memory_space<vmem>>, %arg5: memref<1x128x32xf32, #tpu.memory_space<vmem>>) attributes {dimension_semantics = [#tpu.dimension_semantics<parallel>], iteration_bounds = array<i64: 2>, scalar_prefetch = 0 : i64, scratch_operands = 0 : i64, tpu.core_type = #tpu.core_type<tc>, window_params = [{transform_indices = @transform_0, window_bounds = array<i64: 1, 128, 32>}, {pipeline_mode = #tpu.pipeline_mode<synchronous>, transform_indices = @transform_1, window_bounds = array<i64: 3, 32, 32>}, {pipeline_mode = #tpu.pipeline_mode<synchronous>, transform_indices = @transform_2, window_bounds = array<i64: 1, 32>}, {pipeline_mode = #tpu.pipeline_mode<synchronous>, transform_indices = @transform_3, window_bounds = array<i64: 1, 32>}, {transform_indices = @transform_4, window_bounds = array<i64: 1, 128, 32>}]} {
    %c0 = arith.constant 0 : index
    %c0_0 = arith.constant 0 : index
    %c0_1 = arith.constant 0 : index
    %0 = vector.load %arg1[%c0, %c0_0, %c0_1] : memref<1x128x32xf32, #tpu.memory_space<vmem>>, vector<1x128x32xf32>
    %1 = vector.shape_cast %0 : vector<1x128x32xf32> to vector<128x32xf32>
    %c0_2 = arith.constant 0 : index
    %c0_3 = arith.constant 0 : index
    %2 = vector.load %arg3[%c0_2, %c0_3] : memref<1x32xf32, #tpu.memory_space<vmem>>, vector<1x32xf32>
    %3 = vector.extract_strided_slice %1 {offsets = [0, 0], sizes = [126, 32], strides = [1, 1]} : vector<128x32xf32> to vector<126x32xf32>
    %4 = arith.truncf %3 : vector<126x32xf32> to vector<126x32xbf16>
    %c0_4 = arith.constant 0 : index
    %c0_5 = arith.constant 0 : index
    %c0_6 = arith.constant 0 : index
    %5 = vector.load %arg2[%c0_4, %c0_5, %c0_6] : memref<3x32x32xbf16, #tpu.memory_space<vmem>>, vector<1x32x32xbf16>
    %6 = vector.shape_cast %5 : vector<1x32x32xbf16> to vector<32x32xbf16>
    %cst = arith.constant dense<0.000000e+00> : vector<126x32xf32>
    %7 = tpu.matmul %4, %6, %cst {dimension_numbers = #tpu.dot_dimension_numbers<[1], [0], [0], [1], [0, 0, 1, 1], [], []>} : vector<126x32xbf16>, vector<32x32xbf16>, vector<126x32xf32> -> vector<126x32xf32>
    %8 = vector.broadcast %2 : vector<1x32xf32> to vector<126x32xf32>
    %9 = arith.addf %8, %7 : vector<126x32xf32>
    %10 = vector.extract_strided_slice %1 {offsets = [1, 0], sizes = [126, 32], strides = [1, 1]} : vector<128x32xf32> to vector<126x32xf32>
    %11 = arith.truncf %10 : vector<126x32xf32> to vector<126x32xbf16>
    %c1 = arith.constant 1 : index
    %c0_7 = arith.constant 0 : index
    %c0_8 = arith.constant 0 : index
    %12 = vector.load %arg2[%c1, %c0_7, %c0_8] : memref<3x32x32xbf16, #tpu.memory_space<vmem>>, vector<1x32x32xbf16>
    %13 = vector.shape_cast %12 : vector<1x32x32xbf16> to vector<32x32xbf16>
    %cst_9 = arith.constant dense<0.000000e+00> : vector<126x32xf32>
    %14 = tpu.matmul %11, %13, %cst_9 {dimension_numbers = #tpu.dot_dimension_numbers<[1], [0], [0], [1], [0, 0, 1, 1], [], []>} : vector<126x32xbf16>, vector<32x32xbf16>, vector<126x32xf32> -> vector<126x32xf32>
    %15 = arith.addf %9, %14 : vector<126x32xf32>
    %16 = vector.extract_strided_slice %1 {offsets = [2, 0], sizes = [126, 32], strides = [1, 1]} : vector<128x32xf32> to vector<126x32xf32>
    %17 = arith.truncf %16 : vector<126x32xf32> to vector<126x32xbf16>
    %c2 = arith.constant 2 : index
    %c0_10 = arith.constant 0 : index
    %c0_11 = arith.constant 0 : index
    %18 = vector.load %arg2[%c2, %c0_10, %c0_11] : memref<3x32x32xbf16, #tpu.memory_space<vmem>>, vector<1x32x32xbf16>
    %19 = vector.shape_cast %18 : vector<1x32x32xbf16> to vector<32x32xbf16>
    %cst_12 = arith.constant dense<0.000000e+00> : vector<126x32xf32>
    %20 = tpu.matmul %17, %19, %cst_12 {dimension_numbers = #tpu.dot_dimension_numbers<[1], [0], [0], [1], [0, 0, 1, 1], [], []>} : vector<126x32xbf16>, vector<32x32xbf16>, vector<126x32xf32> -> vector<126x32xf32>
    %21 = arith.addf %15, %20 : vector<126x32xf32>
    %c0_13 = arith.constant 0 : index
    %c0_14 = arith.constant 0 : index
    %22 = vector.load %arg4[%c0_13, %c0_14] : memref<1x32xf32, #tpu.memory_space<vmem>>, vector<1x32xf32>
    %23 = arith.mulf %21, %21 : vector<126x32xf32>
    %cst_15 = arith.constant dense<0.000000e+00> : vector<126xf32>
    %24 = vector.multi_reduction <add>, %23, %cst_15 [1] : vector<126x32xf32> to vector<126xf32>
    %25 = vector.shape_cast %24 : vector<126xf32> to vector<126x1xf32>
    %cst_16 = arith.constant 3.200000e+01 : f32
    %26 = vector.broadcast %cst_16 : f32 to vector<126x1xf32>
    %27 = arith.divf %25, %26 : vector<126x1xf32>
    %cst_17 = arith.constant 9.99999974E-6 : f32
    %28 = vector.broadcast %cst_17 : f32 to vector<126x1xf32>
    %29 = arith.addf %27, %28 : vector<126x1xf32>
    %30 = math.rsqrt %29 : vector<126x1xf32>
    %31 = vector.broadcast %30 : vector<126x1xf32> to vector<126x32xf32>
    %32 = arith.mulf %21, %31 : vector<126x32xf32>
    %33 = vector.broadcast %22 : vector<1x32xf32> to vector<126x32xf32>
    %34 = arith.mulf %32, %33 : vector<126x32xf32>
    %c0_18 = arith.constant 0 : index
    %c0_19 = arith.constant 0 : index
    %c0_20 = arith.constant 0 : index
    %35 = vector.load %arg5[%c0_18, %c0_19, %c0_20] : memref<1x128x32xf32, #tpu.memory_space<vmem>>, vector<1x126x32xf32>
    %36 = vector.shape_cast %35 : vector<1x126x32xf32> to vector<126x32xf32>
    %37 = vector.shape_cast %34 : vector<126x32xf32> to vector<1x126x32xf32>
    tpu.vector_store %arg5[%c0_18, %c0_19, %c0_20], %37 {strides = array<i32>} : memref<1x128x32xf32, #tpu.memory_space<vmem>>, vector<1x126x32xf32>,
    %cst_21 = arith.constant 0.000000e+00 : f32
    %38 = vector.broadcast %cst_21 : f32 to vector<2x32xf32>
    %c0_22 = arith.constant 0 : index
    %c126 = arith.constant 126 : index
    %c0_23 = arith.constant 0 : index
    %39 = vector.load %arg5[%c0_22, %c126, %c0_23] : memref<1x128x32xf32, #tpu.memory_space<vmem>>, vector<1x2x32xf32>
    %40 = vector.shape_cast %39 : vector<1x2x32xf32> to vector<2x32xf32>
    %41 = vector.shape_cast %38 : vector<2x32xf32> to vector<1x2x32xf32>
    tpu.vector_store %arg5[%c0_22, %c126, %c0_23], %41 {strides = array<i32>} : memref<1x128x32xf32, #tpu.memory_space<vmem>>, vector<1x2x32xf32>,
    return
  }
  func.func @transform_0(%arg0: i32) -> (i32, i32, i32) {
    %c0_i32 = arith.constant 0 : i32
    %c0_i32_0 = arith.constant 0 : i32
    %c0_i32_1 = arith.constant 0 : i32
    return %arg0, %c0_i32, %c0_i32_0 : i32, i32, i32
  }
  func.func @transform_1(%arg0: i32) -> (i32, i32, i32) {
    %c0_i32 = arith.constant 0 : i32
    %c0_i32_0 = arith.constant 0 : i32
    %c0_i32_1 = arith.constant 0 : i32
    %c0_i32_2 = arith.constant 0 : i32
    return %c0_i32, %c0_i32_0, %c0_i32_1 : i32, i32, i32
  }
  func.func @transform_2(%arg0: i32) -> (i32, i32) {
    %c0_i32 = arith.constant 0 : i32
    %c0_i32_0 = arith.constant 0 : i32
    %c0_i32_1 = arith.constant 0 : i32
    return %c0_i32, %c0_i32_0 : i32, i32
  }
  func.func @transform_3(%arg0: i32) -> (i32, i32) {
    %c0_i32 = arith.constant 0 : i32
    %c0_i32_0 = arith.constant 0 : i32
    %c0_i32_1 = arith.constant 0 : i32
    return %c0_i32, %c0_i32_0 : i32, i32
  }
  func.func @transform_4(%arg0: i32) -> (i32, i32, i32) {
    %c0_i32 = arith.constant 0 : i32
    %c0_i32_0 = arith.constant 0 : i32
    %c0_i32_1 = arith.constant 0 : i32
    return %arg0, %c0_i32, %c0_i32_0 : i32, i32, i32
  }
}

</mosaic_0001>

<llo_original>
// kernel: tpu_custom_call.1
$region0: #{tpu_custom_call.1}
  #allocation0 [shape = 'u32[]', space=smem, size = 0x4, offset = 0x4, fixed_abs, tag = 'smem constant byte address 0x4 - core index']
  #allocation1 [shape = 'u32[144,128]{1,0:T(1,128)}', space=vmem, size = 0x12000, scoped, tag = 'internal scratch']
  %s0 = inlined_call_operand.vmem [shape: f32[2,128,32], index: 0, kind: input, shape index: {}]
  %s1 = inlined_call_operand.vmem [shape: bf16[3,32,32], index: 1, kind: input, shape index: {}]
  %s2 = inlined_call_operand.vmem [shape: f32[1,32], index: 2, kind: input, shape index: {}]
  %s3 = inlined_call_operand.vmem [shape: f32[1,32], index: 3, kind: input, shape index: {}]
  %s4 = inlined_call_operand.vmem [shape: f32[2,128,32], index: 4, kind: output, shape index: {}]
  %s5 = sld [smem:[#allocation0]]
  $region49: #{tpu_custom_call.1} parent=0
    _
  %s7 = ssub.s32 1, %s5
  %s8 = scalar_select 0, %s7, %s5
  loop: start=0, step=1, limit=4
  $region2: #{tpu_custom_call.1} parent=0 // loop_pre_header
    _
  $region3: #{tpu_custom_call.1} parent=0 // loop_header
    %s10 = sphi 0, %s14
    %p11 = scmp.ge.s32.totalorder %s10, 4
    %s20 = sphi 0, %s22
    %s23 = sphi 0, %s20
    %s24 = sphi 0, %s23
    %s40 = sphi 0, %s24
    %s44 = sphi 0, %s44
    %s46 = sphi 0, %s44
    %s47 = sphi 0, %s46
    %s61 = sphi 0, %s47
    %s65 = sphi 0, %s65
    %s67 = sphi 0, %s65
    %s68 = sphi 0, %s67
    %s82 = sphi 0, %s68
    %s86 = sphi 0, %s86
    %s88 = sphi 0, %s86
    %s89 = sphi 0, %s88
    %s103 = sphi 0, %s89
    %s109 = sphi 0, %s111
    %s112 = sphi 0, %s109
    %s113 = sphi 0, %s112
    %s129 = sphi 0, %s113
  $region4: #{tpu_custom_call.1} parent=0 // loop_header_branch
    %13 = sbr.rel (%p11) target = $region8
  $region5: #{tpu_custom_call.1} parent=0 // loop_body
    %s15 = ssub.s32 %s10, 1
    %s16 = ssub.s32 %s10, 2
    %s17 = sadd.s32 %s10, 1
    %s18 = ssub.s32 %s10, %s17
    %p19 = scmp.eq.s32.totalorder %s18, 0
    %s21 = sadd.s32 %s20, 1
    %s22 = scalar_select %p19, %s20, %s21
    %p25 = pneg %p19
    %p26 = scmp.eq.s32.totalorder %s10, 1
    %p27 = por %p25, %p26
    %p28 = scmp.ne.s32.totalorder %s20, %s23
    %p29 = scmp.eq.s32.totalorder %s10, 0
    %p30 = por %p28, %p29
    %p31 = scmp.ne.s32.totalorder %s20, %s23
    %p32 = scmp.eq.s32.totalorder %s15, 1
    %p33 = por %p31, %p32
    %p34 = scmp.ne.s32.totalorder %s23, %s24
    %p35 = scmp.eq.s32.totalorder %s15, 0
    %p36 = por %p34, %p35
    %p37 = scmp.ne.s32.totalorder %s23, %s24
    %p38 = scmp.eq.s32.totalorder %s16, 1
    %p39 = por %p37, %p38
    %p41 = scmp.ne.s32.totalorder %s24, %s40
    %p42 = scmp.eq.s32.totalorder %s16, 0
    %p43 = por %p41, %p42
    %s45 = sadd.s32 %s44, 1
    %p48 = scmp.eq.s32.totalorder %s10, 1
    %p49 = scmp.ne.s32.totalorder %s44, %s46
    %p50 = scmp.eq.s32.totalorder %s10, 0
    %p51 = por %p49, %p50
    %p52 = scmp.ne.s32.totalorder %s44, %s46
    %p53 = scmp.eq.s32.totalorder %s15, 1
    %p54 = por %p52, %p53
    %p55 = scmp.ne.s32.totalorder %s46, %s47
    %p56 = scmp.eq.s32.totalorder %s15, 0
    %p57 = por %p55, %p56
    %p58 = scmp.ne.s32.totalorder %s46, %s47
    %p59 = scmp.eq.s32.totalorder %s16, 1
    %p60 = por %p58, %p59
    %p62 = scmp.ne.s32.totalorder %s47, %s61
    %p63 = scmp.eq.s32.totalorder %s16, 0
    %p64 = por %p62, %p63
    %s66 = sadd.s32 %s65, 1
    %p69 = scmp.eq.s32.totalorder %s10, 1
    %p70 = scmp.ne.s32.totalorder %s65, %s67
    %p71 = scmp.eq.s32.totalorder %s10, 0
    %p72 = por %p70, %p71
    %p73 = scmp.ne.s32.totalorder %s65, %s67
    %p74 = scmp.eq.s32.totalorder %s15, 1
    %p75 = por %p73, %p74
    %p76 = scmp.ne.s32.totalorder %s67, %s68
    %p77 = scmp.eq.s32.totalorder %s15, 0
    %p78 = por %p76, %p77
    %p79 = scmp.ne.s32.totalorder %s67, %s68
    %p80 = scmp.eq.s32.totalorder %s16, 1
    %p81 = por %p79, %p80
    %p83 = scmp.ne.s32.totalorder %s68, %s82
    %p84 = scmp.eq.s32.totalorder %s16, 0
    %p85 = por %p83, %p84
    %s87 = sadd.s32 %s86, 1
    %p90 = scmp.eq.s32.totalorder %s10, 1
    %p91 = scmp.ne.s32.totalorder %s86, %s88
    %p92 = scmp.eq.s32.totalorder %s10, 0
    %p93 = por %p91, %p92
    %p94 = scmp.ne.s32.totalorder %s86, %s88
    %p95 = scmp.eq.s32.totalorder %s15, 1
    %p96 = por %p94, %p95
    %p97 = scmp.ne.s32.totalorder %s88, %s89
    %p98 = scmp.eq.s32.totalorder %s15, 0
    %p99 = por %p97, %p98
    %p100 = scmp.ne.s32.totalorder %s88, %s89
    %p101 = scmp.eq.s32.totalorder %s16, 1
    %p102 = por %p100, %p101
    %p104 = scmp.ne.s32.totalorder %s89, %s103
    %p105 = scmp.eq.s32.totalorder %s16, 0
    %p106 = por %p104, %p105
    %s107 = ssub.s32 %s10, %s17
    %p108 = scmp.eq.s32.totalorder %s107, 0
    %s110 = sadd.s32 %s109, 1
    %s111 = scalar_select %p108, %s109, %s110
    %p114 = pneg %p108
    %p115 = scmp.eq.s32.totalorder %s10, 1
    %p116 = por %p114, %p115
    %p117 = scmp.ne.s32.totalorder %s109, %s112
    %p118 = scmp.eq.s32.totalorder %s10, 0
    %p119 = por %p117, %p118
    %p120 = scmp.ne.s32.totalorder %s109, %s112
    %p121 = scmp.eq.s32.totalorder %s15, 1
    %p122 = por %p120, %p121
    %p123 = scmp.ne.s32.totalorder %s112, %s113
    %p124 = scmp.eq.s32.totalorder %s15, 0
    %p125 = por %p123, %p124
    %p126 = scmp.ne.s32.totalorder %s112, %s113
    %p127 = scmp.eq.s32.totalorder %s16, 1
    %p128 = por %p126, %p127
    %p130 = scmp.ne.s32.totalorder %s113, %s129
    %p131 = scmp.eq.s32.totalorder %s16, 0
    %p132 = por %p130, %p131
    %p133 = scmp.le.s32.totalorder 1, %s10
    %p134 = scmp.lt.s32.totalorder %s10, 3
    %p135 = pnand %p133, %p134
    %p136 = pneg %p135
    // Predicated region
    $region9: #{tpu_custom_call.1} parent=5 // pred_check
      _
    $region10: #{tpu_custom_call.1} parent=5 // pred_check_branch
      %138 = sbr.rel (%p135) target = $region12
    $region11: #{tpu_custom_call.1} parent=5 // pred_region
      %s139 = ssub.s32 %s10, 1
      // Predicated region
      $region13: #{tpu_custom_call.1} parent=11 // pred_check
        %p140 = pneg %p57
      $region14: #{tpu_custom_call.1} parent=11 // pred_check_branch
        %142 = sbr.rel (%p140) target = $region16
      $region15: #{tpu_custom_call.1} parent=11 // pred_region
        _
      $region16: #{tpu_custom_call.1} parent=11 // pred_fallthru
        _
      // Predicated region
      $region17: #{tpu_custom_call.1} parent=11 // pred_check
        %p143 = pneg %p78
      $region18: #{tpu_custom_call.1} parent=11 // pred_check_branch
        %145 = sbr.rel (%p143) target = $region20
      $region19: #{tpu_custom_call.1} parent=11 // pred_region
        _
      $region20: #{tpu_custom_call.1} parent=11 // pred_fallthru
        _
      // Predicated region
      $region21: #{tpu_custom_call.1} parent=11 // pred_check
        %p146 = pneg %p99
      $region22: #{tpu_custom_call.1} parent=11 // pred_check_branch
        %148 = sbr.rel (%p146) target = $region24
      $region23: #{tpu_custom_call.1} parent=11 // pred_region
        _
      $region24: #{tpu_custom_call.1} parent=11 // pred_fallthru
        _
    $region12: #{tpu_custom_call.1} parent=5 // pred_fallthru
      _
    %p149 = scmp.lt.s32.totalorder %s10, 2
    // Predicated region
    $region25: #{tpu_custom_call.1} parent=5 // pred_check
      %p150 = pneg %p149
    $region26: #{tpu_custom_call.1} parent=5 // pred_check_branch
      %152 = sbr.rel (%p150) target = $region28
    $region27: #{tpu_custom_call.1} parent=5 // pred_region
      // Predicated region
      $region29: #{tpu_custom_call.1} parent=27 // pred_check
        %p153 = pneg %p30
      $region30: #{tpu_custom_call.1} parent=27 // pred_check_branch
        %155 = sbr.rel (%p153) target = $region32
      $region31: #{tpu_custom_call.1} parent=27 // pred_region
        %p156 = scmp.lt.s32.totalorder %s10, 1
        %s157 = scalar_select %p156, %s10, 1
        %s158 = smul.addr %s157, 16
        %s159 = smul.addr %s158, 8
        %s160 = scalar_lea.vmem %s0, %s159
      $region32: #{tpu_custom_call.1} parent=27 // pred_fallthru
        _
    $region28: #{tpu_custom_call.1} parent=5 // pred_fallthru
      _
    %p161 = scmp.le.s32.totalorder 1, %s10
    %p162 = scmp.lt.s32.totalorder %s10, 3
    %p163 = pnand %p161, %p162
    %p164 = pneg %p163
    // Predicated region
    $region33: #{tpu_custom_call.1} parent=5 // pred_check
      _
    $region34: #{tpu_custom_call.1} parent=5 // pred_check_branch
      %166 = sbr.rel (%p163) target = $region36
    $region35: #{tpu_custom_call.1} parent=5 // pred_region
      %s167 = ssub.s32 %s10, 1
      %p168 = scmp.lt.s32.totalorder %s15, 1
      %s169 = scalar_select %p168, %s15, 1
      %s170 = smul.addr %s169, 16
      %s171 = smul.addr %s170, 8
      %s172 = scalar_lea.vmem %s0, %s171
      %p173 = pneg %p36
      %p174 = pneg %p33
      %p175 = pneg %p57
      %p176 = pneg %p54
      %p177 = pneg %p78
      %p178 = pneg %p75
      %p179 = pneg %p99
      %p180 = pneg %p96
      %p181 = pneg %p125
      %p182 = pneg %p122
      %p183 = scmp.lt.s32.totalorder %s15, 1
      %s184 = scalar_select %p183, %s15, 1
      %s185 = smul.addr %s184, 16
      %s186 = smul.addr %s185, 8
      %s187 = scalar_lea.vmem %s4, %s186
      %p188 = scmp.lt.s32.totalorder %s15, 1
      %s189 = scalar_select %p188, %s15, 1
      %s190 = smul.addr %s189, 16
      %s191 = smul.addr %s190, 8
      %s192 = scalar_lea.vmem %s0, %s191
      %p193 = scmp.lt.s32.totalorder %s15, 1
      %s194 = scalar_select %p193, %s15, 1
      %s195 = smul.addr %s194, 16
      %s196 = smul.addr %s195, 8
      %s197 = scalar_lea.vmem %s4, %s196
      %v199 = vld [vmem:[%s192] sm:$0xff]
      %v200 = vld [vmem:[%s192 + $0x8] sm:$0xff]
      %v201 = vld [vmem:[%s192 + $0x10] sm:$0xff]
      %v202 = vld [vmem:[%s192 + $0x18] sm:$0xff]
      %v203 = vld [vmem:[%s192 + $0x20] sm:$0xff]
      %v204 = vld [vmem:[%s192 + $0x28] sm:$0xff]
      %v205 = vld [vmem:[%s192 + $0x30] sm:$0xff]
      %v206 = vld [vmem:[%s192 + $0x38] sm:$0xff]
      %v207 = vld [vmem:[%s192 + $0x40] sm:$0xff]
      %v208 = vld [vmem:[%s192 + $0x48] sm:$0xff]
      %v209 = vld [vmem:[%s192 + $0x50] sm:$0xff]
      %v210 = vld [vmem:[%s192 + $0x58] sm:$0xff]
      %v211 = vld [vmem:[%s192 + $0x60] sm:$0xff]
      %v212 = vld [vmem:[%s192 + $0x68] sm:$0xff]
      %v213 = vld [vmem:[%s192 + $0x70] sm:$0xff]
      %v214 = vld [vmem:[%s192 + $0x78] sm:$0xff]
      %v215 = vld [vmem:[%s2] sm:$0x1]
      %v216 = vpack.c.bf16 %v200, %v199
      %v217 = vpack.c.bf16 %v202, %v201
      %v218 = vpack.c.bf16 %v204, %v203
      %v219 = vpack.c.bf16 %v206, %v205
      %v220 = vpack.c.bf16 %v208, %v207
      %v221 = vpack.c.bf16 %v210, %v209
      %v222 = vpack.c.bf16 %v212, %v211
      %v223 = vpack.c.bf16 %v214, %v213
      %v224 = vld [vmem:[%s1] sm:$0xf]
      %v225 = vld [vmem:[%s1 + $0x4] sm:$0xf]
      %v226 = vld [vmem:[%s1 + $0x8] sm:$0xf]
      %v227 = vld [vmem:[%s1 + $0xc] sm:$0xf]
      %v232 = vunpack.c.l.b16 %v224
      %v233 = vunpack.c.l.b16 %v225
      %v234 = vunpack.c.l.b16 %v226
      %v235 = vunpack.c.l.b16 %v227
      %v236 = vpack.c.b16 %v233, %v232
      %v237 = vpack.c.b16 %v235, %v234
      %vm240 = vcmask 261120
      %v242 = vsel %vm240, %v216, 0
      %v245 = vsel %vm240, %v217, 0
      %v248 = vsel %vm240, %v218, 0
      %v251 = vsel %vm240, %v219, 0
      %v254 = vsel %vm240, %v220, 0
      %v257 = vsel %vm240, %v221, 0
      %v260 = vsel %vm240, %v222, 0
      %v263 = vsel %vm240, %v223, 0
      %265 = vmatprep.subr.bf16.mxu0 0
      %266 = vmatpush1.bf16.msra.mxu0 %v236
      %267 = vmatprep.subr.bf16.mxu0 0
      %268 = vmatpush1.bf16.msra.mxu0 %v237
      %269 = vmatprep.subr.bf16.mxu0 0
      %270 = vmatpush1.bf16.msra.mxu0 0
      %271 = vmatprep.subr.bf16.mxu0 0
      %272 = vmatpush1.bf16.msra.mxu0 0
      %273 = vmatprep.subr.bf16.mxu0 0
      %274 = vmatpush1.bf16.msra.mxu0 0
      %275 = vmatprep.subr.bf16.mxu0 0
      %276 = vmatpush1.bf16.msra.mxu0 0
      %277 = vmatprep.subr.bf16.mxu0 0
      %278 = vmatpush1.bf16.msra.mxu0 0
      %279 = vmatprep.subr.bf16.mxu0 0
      %280 = vmatpush1.bf16.msra.mxu0 0
      %281 = vmatprep.subr.bf16.mxu0 0
      %282 = vmatpush1.bf16.msra.mxu0 0
      %283 = vmatprep.subr.bf16.mxu0 0
      %284 = vmatpush1.bf16.msra.mxu0 0
      %285 = vmatprep.subr.bf16.mxu0 0
      %286 = vmatpush1.bf16.msra.mxu0 0
      %287 = vmatprep.subr.bf16.mxu0 0
      %288 = vmatpush1.bf16.msra.mxu0 0
      %289 = vmatprep.subr.bf16.mxu0 0
      %290 = vmatpush1.bf16.msra.mxu0 0
      %291 = vmatprep.subr.bf16.mxu0 0
      %292 = vmatpush1.bf16.msra.mxu0 0
      %293 = vmatprep.subr.bf16.mxu0 0
      %294 = vmatpush1.bf16.msra.mxu0 0
      %295 = vmatprep.subr.bf16.mxu0 0
      %296 = vmatpush1.bf16.msra.mxu0 0
      %297 = vmatprep.mubr.bf16.mxu0 0
      %298 = vmatmul.mubr.bf16.gmra.mrb[0].mxu0 %v242
      %v299 = vpop.f32.mrb[0].mxu0
      %v300 = vadd.f32 0.0, %v299
      %v301 = vpop.f32.mrb[0].mxu0
      %v302 = vpop.f32.mrb[0].mxu0
      %v303 = vadd.f32 0.0, %v302
      %v304 = vpop.f32.mrb[0].mxu0
      %305 = vmatprep.mubr.bf16.mxu0 0
      %306 = vmatmul.mubr.bf16.gmra.mrb[0].mxu0 %v245
      %v307 = vpop.f32.mrb[0].mxu0
      %v308 = vadd.f32 0.0, %v307
      %v309 = vpop.f32.mrb[0].mxu0
      %v310 = vpop.f32.mrb[0].mxu0
      %v311 = vadd.f32 0.0, %v310
      %v312 = vpop.f32.mrb[0].mxu0
      %313 = vmatprep.mubr.bf16.mxu0 0
      %314 = vmatmul.mubr.bf16.gmra.mrb[0].mxu0 %v248
      %v315 = vpop.f32.mrb[0].mxu0
      %v316 = vadd.f32 0.0, %v315
      %v317 = vpop.f32.mrb[0].mxu0
      %v318 = vpop.f32.mrb[0].mxu0
      %v319 = vadd.f32 0.0, %v318
      %v320 = vpop.f32.mrb[0].mxu0
      %321 = vmatprep.mubr.bf16.mxu0 0
      %322 = vmatmul.mubr.bf16.gmra.mrb[0].mxu0 %v251
      %v323 = vpop.f32.mrb[0].mxu0
      %v324 = vadd.f32 0.0, %v323
      %v325 = vpop.f32.mrb[0].mxu0
      %v326 = vpop.f32.mrb[0].mxu0
      %v327 = vadd.f32 0.0, %v326
      %v328 = vpop.f32.mrb[0].mxu0
      %329 = vmatprep.mubr.bf16.mxu0 0
      %330 = vmatmul.mubr.bf16.gmra.mrb[0].mxu0 %v254
      %v331 = vpop.f32.mrb[0].mxu0
      %v332 = vadd.f32 0.0, %v331
      %v333 = vpop.f32.mrb[0].mxu0
      %v334 = vpop.f32.mrb[0].mxu0
      %v335 = vadd.f32 0.0, %v334
      %v336 = vpop.f32.mrb[0].mxu0
      %337 = vmatprep.mubr.bf16.mxu0 0
      %338 = vmatmul.mubr.bf16.gmra.mrb[0].mxu0 %v257
      %v339 = vpop.f32.mrb[0].mxu0
      %v340 = vadd.f32 0.0, %v339
      %v341 = vpop.f32.mrb[0].mxu0
      %v342 = vpop.f32.mrb[0].mxu0
      %v343 = vadd.f32 0.0, %v342
      %v344 = vpop.f32.mrb[0].mxu0
      %345 = vmatprep.mubr.bf16.mxu0 0
      %346 = vmatmul.mubr.bf16.gmra.mrb[0].mxu0 %v260
      %v347 = vpop.f32.mrb[0].mxu0
      %v348 = vadd.f32 0.0, %v347
      %v349 = vpop.f32.mrb[0].mxu0
      %v350 = vpop.f32.mrb[0].mxu0
      %v351 = vadd.f32 0.0, %v350
      %v352 = vpop.f32.mrb[0].mxu0
      %353 = vmatprep.mubr.bf16.mxu0 0
      %354 = vmatmul.mubr.bf16.gmra.mrb[0].mxu0 %v263
      %v355 = vpop.f32.mrb[0].mxu0
      %v356 = vadd.f32 0.0, %v355
      %v357 = vpop.f32.mrb[0].mxu0
      %v358 = vpop.f32.mrb[0].mxu0
      %v359 = vadd.f32 0.0, %v358
      %v360 = vpop.f32.mrb[0].mxu0
      %361 = vdwg.mxu0
      %v363 = vlaneseq
      %v364 = vshrl.u32 %v363, 7
      %v365 = vsub.s32 0, %v364
      %v366 = vrot.slane %v215, %v365
      %v368 = vadd.f32 %v366, %v300
      %v369 = vadd.f32 %v366, %v303
      %v370 = vadd.f32 %v366, %v308
      %v371 = vadd.f32 %v366, %v311
      %v372 = vadd.f32 %v366, %v316
      %v373 = vadd.f32 %v366, %v319
      %v374 = vadd.f32 %v366, %v324
      %v375 = vadd.f32 %v366, %v327
      %v376 = vadd.f32 %v366, %v332
      %v377 = vadd.f32 %v366, %v335
      %v378 = vadd.f32 %v366, %v340
      %v379 = vadd.f32 %v366, %v343
      %v380 = vadd.f32 %v366, %v348
      %v381 = vadd.f32 %v366, %v351
      %v382 = vadd.f32 %v366, %v356
      %v383 = vadd.f32 %v366, %v359
      %s384 = scalar_lea.vmem %s1, 16
      %v385 = vld [vmem:[%s384] sm:$0xf]
      %v386 = vld [vmem:[%s384 + $0x4] sm:$0xf]
      %v387 = vld [vmem:[%s384 + $0x8] sm:$0xf]
      %v388 = vld [vmem:[%s384 + $0xc] sm:$0xf]
      %vm389 = vsmask.f32 7424
      %v390 = vshrl.u32 %v216, 16
      %v392 = vshll.u32 %v216, 16
      %v394 = vrot.slane %v392, 1
      %v395 = vor.u32 %v390, %v394
      %v396 = vshll.u32 %v217, 16
      %v398 = vrot.slane %v396, 1
      %v399 = vsel %vm389, %v395, %v398
      %v400 = vshrl.u32 %v217, 16
      %v402 = vor.u32 %v400, %v398
      %v403 = vshll.u32 %v218, 16
      %v405 = vrot.slane %v403, 1
      %v406 = vsel %vm389, %v402, %v405
      %v407 = vshrl.u32 %v218, 16
      %v409 = vor.u32 %v407, %v405
      %v410 = vshll.u32 %v219, 16
      %v412 = vrot.slane %v410, 1
      %v413 = vsel %vm389, %v409, %v412
      %v414 = vshrl.u32 %v219, 16
      %v416 = vor.u32 %v414, %v412
      %v417 = vshll.u32 %v220, 16
      %v419 = vrot.slane %v417, 1
      %v420 = vsel %vm389, %v416, %v419
      %v421 = vshrl.u32 %v220, 16
      %v423 = vor.u32 %v421, %v419
      %v424 = vshll.u32 %v221, 16
      %v426 = vrot.slane %v424, 1
      %v427 = vsel %vm389, %v423, %v426
      %v428 = vshrl.u32 %v221, 16
      %v430 = vor.u32 %v428, %v426
      %v431 = vshll.u32 %v222, 16
      %v433 = vrot.slane %v431, 1
      %v434 = vsel %vm389, %v430, %v433
      %v435 = vshrl.u32 %v222, 16
      %v437 = vor.u32 %v435, %v433
      %v438 = vshll.u32 %v223, 16
      %v440 = vrot.slane %v438, 1
      %v441 = vsel %vm389, %v437, %v440
      %v442 = vshrl.u32 %v223, 16
      %v444 = vor.u32 %v442, %v440
      %v449 = vunpack.c.l.b16 %v385
      %v450 = vunpack.c.l.b16 %v386
      %v451 = vunpack.c.l.b16 %v387
      %v452 = vunpack.c.l.b16 %v388
      %v453 = vpack.c.b16 %v450, %v449
      %v454 = vpack.c.b16 %v452, %v451
      %v458 = vsel %vm240, %v399, 0
      %v461 = vsel %vm240, %v406, 0
      %v464 = vsel %vm240, %v413, 0
      %v467 = vsel %vm240, %v420, 0
      %v470 = vsel %vm240, %v427, 0
      %v473 = vsel %vm240, %v434, 0
      %v476 = vsel %vm240, %v441, 0
      %v479 = vsel %vm240, %v444, 0
      %481 = vmatprep.subr.bf16.mxu0 0
      %482 = vmatpush1.bf16.msra.mxu0 %v453
      %483 = vmatprep.subr.bf16.mxu0 0
      %484 = vmatpush1.bf16.msra.mxu0 %v454
      %485 = vmatprep.subr.bf16.mxu0 0
      %486 = vmatpush1.bf16.msra.mxu0 0
      %487 = vmatprep.subr.bf16.mxu0 0
      %488 = vmatpush1.bf16.msra.mxu0 0
      %489 = vmatprep.subr.bf16.mxu0 0
      %490 = vmatpush1.bf16.msra.mxu0 0
      %491 = vmatprep.subr.bf16.mxu0 0
      %492 = vmatpush1.bf16.msra.mxu0 0
      %493 = vmatprep.subr.bf16.mxu0 0
      %494 = vmatpush1.bf16.msra.mxu0 0
      %495 = vmatprep.subr.bf16.mxu0 0
      %496 = vmatpush1.bf16.msra.mxu0 0
      %497 = vmatprep.subr.bf16.mxu0 0
      %498 = vmatpush1.bf16.msra.mxu0 0
      %499 = vmatprep.subr.bf16.mxu0 0
      %500 = vmatpush1.bf16.msra.mxu0 0
      %501 = vmatprep.subr.bf16.mxu0 0
      %502 = vmatpush1.bf16.msra.mxu0 0
      %503 = vmatprep.subr.bf16.mxu0 0
      %504 = vmatpush1.bf16.msra.mxu0 0
      %505 = vmatprep.subr.bf16.mxu0 0
      %506 = vmatpush1.bf16.msra.mxu0 0
      %507 = vmatprep.subr.bf16.mxu0 0
      %508 = vmatpush1.bf16.msra.mxu0 0
      %509 = vmatprep.subr.bf16.mxu0 0
      %510 = vmatpush1.bf16.msra.mxu0 0
      %511 = vmatprep.subr.bf16.mxu0 0
      %512 = vmatpush1.bf16.msra.mxu0 0
      %513 = vmatprep.mubr.bf16.mxu0 0
      %514 = vmatmul.mubr.bf16.gmra.mrb[0].mxu0 %v458
      %v515 = vpop.f32.mrb[0].mxu0
      %v516 = vadd.f32 0.0, %v515
      %v517 = vpop.f32.mrb[0].mxu0
      %v518 = vpop.f32.mrb[0].mxu0
      %v519 = vadd.f32 0.0, %v518
      %v520 = vpop.f32.mrb[0].mxu0
      %521 = vmatprep.mubr.bf16.mxu0 0
      %522 = vmatmul.mubr.bf16.gmra.mrb[0].mxu0 %v461
      %v523 = vpop.f32.mrb[0].mxu0
      %v524 = vadd.f32 0.0, %v523
      %v525 = vpop.f32.mrb[0].mxu0
      %v526 = vpop.f32.mrb[0].mxu0
      %v527 = vadd.f32 0.0, %v526
      %v528 = vpop.f32.mrb[0].mxu0
      %529 = vmatprep.mubr.bf16.mxu0 0
      %530 = vmatmul.mubr.bf16.gmra.mrb[0].mxu0 %v464
      %v531 = vpop.f32.mrb[0].mxu0
      %v532 = vadd.f32 0.0, %v531
      %v533 = vpop.f32.mrb[0].mxu0
      %v534 = vpop.f32.mrb[0].mxu0
      %v535 = vadd.f32 0.0, %v534
      %v536 = vpop.f32.mrb[0].mxu0
      %537 = vmatprep.mubr.bf16.mxu0 0
      %538 = vmatmul.mubr.bf16.gmra.mrb[0].mxu0 %v467
      %v539 = vpop.f32.mrb[0].mxu0
      %v540 = vadd.f32 0.0, %v539
      %v541 = vpop.f32.mrb[0].mxu0
      %v542 = vpop.f32.mrb[0].mxu0
      %v543 = vadd.f32 0.0, %v542
      %v544 = vpop.f32.mrb[0].mxu0
      %545 = vmatprep.mubr.bf16.mxu0 0
      %546 = vmatmul.mubr.bf16.gmra.mrb[0].mxu0 %v470
      %v547 = vpop.f32.mrb[0].mxu0
      %v548 = vadd.f32 0.0, %v547
      %v549 = vpop.f32.mrb[0].mxu0
      %v550 = vpop.f32.mrb[0].mxu0
      %v551 = vadd.f32 0.0, %v550
      %v552 = vpop.f32.mrb[0].mxu0
      %553 = vmatprep.mubr.bf16.mxu0 0
      %554 = vmatmul.mubr.bf16.gmra.mrb[0].mxu0 %v473
      %v555 = vpop.f32.mrb[0].mxu0
      %v556 = vadd.f32 0.0, %v555
      %v557 = vpop.f32.mrb[0].mxu0
      %v558 = vpop.f32.mrb[0].mxu0
      %v559 = vadd.f32 0.0, %v558
      %v560 = vpop.f32.mrb[0].mxu0
      %561 = vmatprep.mubr.bf16.mxu0 0
      %562 = vmatmul.mubr.bf16.gmra.mrb[0].mxu0 %v476
      %v563 = vpop.f32.mrb[0].mxu0
      %v564 = vadd.f32 0.0, %v563
      %v565 = vpop.f32.mrb[0].mxu0
      %v566 = vpop.f32.mrb[0].mxu0
      %v567 = vadd.f32 0.0, %v566
      %v568 = vpop.f32.mrb[0].mxu0
      %569 = vmatprep.mubr.bf16.mxu0 0
      %570 = vmatmul.mubr.bf16.gmra.mrb[0].mxu0 %v479
      %v571 = vpop.f32.mrb[0].mxu0
      %v572 = vadd.f32 0.0, %v571
      %v573 = vpop.f32.mrb[0].mxu0
      %v574 = vpop.f32.mrb[0].mxu0
      %v575 = vadd.f32 0.0, %v574
      %v576 = vpop.f32.mrb[0].mxu0
      %577 = vdwg.mxu0
      %v578 = vadd.f32 %v368, %v516
      %v579 = vadd.f32 %v369, %v519
      %v580 = vadd.f32 %v370, %v524
      %v581 = vadd.f32 %v371, %v527
      %v582 = vadd.f32 %v372, %v532
      %v583 = vadd.f32 %v373, %v535
      %v584 = vadd.f32 %v374, %v540
      %v585 = vadd.f32 %v375, %v543
      %v586 = vadd.f32 %v376, %v548
      %v587 = vadd.f32 %v377, %v551
      %v588 = vadd.f32 %v378, %v556
      %v589 = vadd.f32 %v379, %v559
      %v590 = vadd.f32 %v380, %v564
      %v591 = vadd.f32 %v381, %v567
      %v592 = vadd.f32 %v382, %v572
      %v593 = vadd.f32 %v383, %v575
      %s594 = scalar_lea.vmem %s1, 32
      %v595 = vld [vmem:[%s594] sm:$0xf]
      %v596 = vld [vmem:[%s594 + $0x4] sm:$0xf]
      %v597 = vld [vmem:[%s594 + $0x8] sm:$0xf]
      %v598 = vld [vmem:[%s594 + $0xc] sm:$0xf]
      %vm607 = vcmask 1046528
      %v608 = vrot.slane %v216, 1
      %v609 = vrot.slane %v217, 1
      %v610 = vsel %vm607, %v608, %v609
      %v611 = vrot.slane %v218, 1
      %v612 = vsel %vm607, %v609, %v611
      %v613 = vrot.slane %v219, 1
      %v614 = vsel %vm607, %v611, %v613
      %v615 = vrot.slane %v220, 1
      %v616 = vsel %vm607, %v613, %v615
      %v617 = vrot.slane %v221, 1
      %v618 = vsel %vm607, %v615, %v617
      %v619 = vrot.slane %v222, 1
      %v620 = vsel %vm607, %v617, %v619
      %v621 = vrot.slane %v223, 1
      %v622 = vsel %vm607, %v619, %v621
      %v627 = vunpack.c.l.b16 %v595
      %v628 = vunpack.c.l.b16 %v596
      %v629 = vunpack.c.l.b16 %v597
      %v630 = vunpack.c.l.b16 %v598
      %v631 = vpack.c.b16 %v628, %v627
      %v632 = vpack.c.b16 %v630, %v629
      %v636 = vsel %vm240, %v610, 0
      %v639 = vsel %vm240, %v612, 0
      %v642 = vsel %vm240, %v614, 0
      %v645 = vsel %vm240, %v616, 0
      %v648 = vsel %vm240, %v618, 0
      %v651 = vsel %vm240, %v620, 0
      %v654 = vsel %vm240, %v622, 0
      %v657 = vsel %vm240, %v621, 0
      %659 = vmatprep.subr.bf16.mxu0 0
      %660 = vmatpush1.bf16.msra.mxu0 %v631
      %661 = vmatprep.subr.bf16.mxu0 0
      %662 = vmatpush1.bf16.msra.mxu0 %v632
      %663 = vmatprep.subr.bf16.mxu0 0
      %664 = vmatpush1.bf16.msra.mxu0 0
      %665 = vmatprep.subr.bf16.mxu0 0
      %666 = vmatpush1.bf16.msra.mxu0 0
      %667 = vmatprep.subr.bf16.mxu0 0
      %668 = vmatpush1.bf16.msra.mxu0 0
      %669 = vmatprep.subr.bf16.mxu0 0
      %670 = vmatpush1.bf16.msra.mxu0 0
      %671 = vmatprep.subr.bf16.mxu0 0
      %672 = vmatpush1.bf16.msra.mxu0 0
      %673 = vmatprep.subr.bf16.mxu0 0
      %674 = vmatpush1.bf16.msra.mxu0 0
      %675 = vmatprep.subr.bf16.mxu0 0
      %676 = vmatpush1.bf16.msra.mxu0 0
      %677 = vmatprep.subr.bf16.mxu0 0
      %678 = vmatpush1.bf16.msra.mxu0 0
      %679 = vmatprep.subr.bf16.mxu0 0
      %680 = vmatpush1.bf16.msra.mxu0 0
      %681 = vmatprep.subr.bf16.mxu0 0
      %682 = vmatpush1.bf16.msra.mxu0 0
      %683 = vmatprep.subr.bf16.mxu0 0
      %684 = vmatpush1.bf16.msra.mxu0 0
      %685 = vmatprep.subr.bf16.mxu0 0
      %686 = vmatpush1.bf16.msra.mxu0 0
      %687 = vmatprep.subr.bf16.mxu0 0
      %688 = vmatpush1.bf16.msra.mxu0 0
      %689 = vmatprep.subr.bf16.mxu0 0
      %690 = vmatpush1.bf16.msra.mxu0 0
      %691 = vmatprep.mubr.bf16.mxu0 0
      %692 = vmatmul.mubr.bf16.gmra.mrb[0].mxu0 %v636
      %v693 = vpop.f32.mrb[0].mxu0
      %v694 = vadd.f32 0.0, %v693
      %v695 = vpop.f32.mrb[0].mxu0
      %v696 = vpop.f32.mrb[0].mxu0
      %v697 = vadd.f32 0.0, %v696
      %v698 = vpop.f32.mrb[0].mxu0
      %699 = vmatprep.mubr.bf16.mxu0 0
      %700 = vmatmul.mubr.bf16.gmra.mrb[0].mxu0 %v639
      %v701 = vpop.f32.mrb[0].mxu0
      %v702 = vadd.f32 0.0, %v701
      %v703 = vpop.f32.mrb[0].mxu0
      %v704 = vpop.f32.mrb[0].mxu0
      %v705 = vadd.f32 0.0, %v704
      %v706 = vpop.f32.mrb[0].mxu0
      %707 = vmatprep.mubr.bf16.mxu0 0
      %708 = vmatmul.mubr.bf16.gmra.mrb[0].mxu0 %v642
      %v709 = vpop.f32.mrb[0].mxu0
      %v710 = vadd.f32 0.0, %v709
      %v711 = vpop.f32.mrb[0].mxu0
      %v712 = vpop.f32.mrb[0].mxu0
      %v713 = vadd.f32 0.0, %v712
      %v714 = vpop.f32.mrb[0].mxu0
      %715 = vmatprep.mubr.bf16.mxu0 0
      %716 = vmatmul.mubr.bf16.gmra.mrb[0].mxu0 %v645
      %v717 = vpop.f32.mrb[0].mxu0
      %v718 = vadd.f32 0.0, %v717
      %v719 = vpop.f32.mrb[0].mxu0
      %v720 = vpop.f32.mrb[0].mxu0
      %v721 = vadd.f32 0.0, %v720
      %v722 = vpop.f32.mrb[0].mxu0
      %723 = vmatprep.mubr.bf16.mxu0 0
      %724 = vmatmul.mubr.bf16.gmra.mrb[0].mxu0 %v648
      %v725 = vpop.f32.mrb[0].mxu0
      %v726 = vadd.f32 0.0, %v725
      %v727 = vpop.f32.mrb[0].mxu0
      %v728 = vpop.f32.mrb[0].mxu0
      %v729 = vadd.f32 0.0, %v728
      %v730 = vpop.f32.mrb[0].mxu0
      %731 = vmatprep.mubr.bf16.mxu0 0
      %732 = vmatmul.mubr.bf16.gmra.mrb[0].mxu0 %v651
      %v733 = vpop.f32.mrb[0].mxu0
      %v734 = vadd.f32 0.0, %v733
      %v735 = vpop.f32.mrb[0].mxu0
      %v736 = vpop.f32.mrb[0].mxu0
      %v737 = vadd.f32 0.0, %v736
      %v738 = vpop.f32.mrb[0].mxu0
      %739 = vmatprep.mubr.bf16.mxu0 0
      %740 = vmatmul.mubr.bf16.gmra.mrb[0].mxu0 %v654
      %v741 = vpop.f32.mrb[0].mxu0
      %v742 = vadd.f32 0.0, %v741
      %v743 = vpop.f32.mrb[0].mxu0
      %v744 = vpop.f32.mrb[0].mxu0
      %v745 = vadd.f32 0.0, %v744
      %v746 = vpop.f32.mrb[0].mxu0
      %747 = vmatprep.mubr.bf16.mxu0 0
      %748 = vmatmul.mubr.bf16.gmra.mrb[0].mxu0 %v657
      %v749 = vpop.f32.mrb[0].mxu0
      %v750 = vadd.f32 0.0, %v749
      %v751 = vpop.f32.mrb[0].mxu0
      %v752 = vpop.f32.mrb[0].mxu0
      %v753 = vadd.f32 0.0, %v752
      %v754 = vpop.f32.mrb[0].mxu0
      %755 = vdwg.mxu0
      %v756 = vadd.f32 %v578, %v694
      %v757 = vadd.f32 %v579, %v697
      %v758 = vadd.f32 %v580, %v702
      %v759 = vadd.f32 %v581, %v705
      %v760 = vadd.f32 %v582, %v710
      %v761 = vadd.f32 %v583, %v713
      %v762 = vadd.f32 %v584, %v718
      %v763 = vadd.f32 %v585, %v721
      %v764 = vadd.f32 %v586, %v726
      %v765 = vadd.f32 %v587, %v729
      %v766 = vadd.f32 %v588, %v734
      %v767 = vadd.f32 %v589, %v737
      %v768 = vadd.f32 %v590, %v742
      %v769 = vadd.f32 %v591, %v745
      %v770 = vadd.f32 %v592, %v750
      %v771 = vadd.f32 %v593, %v753
      %v772 = vld [vmem:[%s3] sm:$0x1]
      %v773 = vmul.f32 %v756, %v756
      %v774 = vmul.f32 %v757, %v757
      %v775 = vmul.f32 %v758, %v758
      %v776 = vmul.f32 %v759, %v759
      %v777 = vmul.f32 %v760, %v760
      %v778 = vmul.f32 %v761, %v761
      %v779 = vmul.f32 %v762, %v762
      %v780 = vmul.f32 %v763, %v763
      %v781 = vmul.f32 %v764, %v764
      %v782 = vmul.f32 %v765, %v765
      %v783 = vmul.f32 %v766, %v766
      %v784 = vmul.f32 %v767, %v767
      %v785 = vmul.f32 %v768, %v768
      %v786 = vmul.f32 %v769, %v769
      %v787 = vmul.f32 %v770, %v770
      %v788 = vmul.f32 %v771, %v771
      %v789 = vsel %vm240, %v773, 0.0
      %790 = vadd.xlane.f32.xlu0 %v789
      %v791 = vpop.xlane.xlu0 %790
      %v792 = vsel %vm240, %v774, 0.0
      %793 = vadd.xlane.f32.xlu0 %v792
      %v794 = vpop.xlane.xlu0 %793
      %v795 = vsel %vm240, %v775, 0.0
      %796 = vadd.xlane.f32.xlu0 %v795
      %v797 = vpop.xlane.xlu0 %796
      %v798 = vsel %vm240, %v776, 0.0
      %799 = vadd.xlane.f32.xlu0 %v798
      %v800 = vpop.xlane.xlu0 %799
      %v801 = vsel %vm240, %v777, 0.0
      %802 = vadd.xlane.f32.xlu0 %v801
      %v803 = vpop.xlane.xlu0 %802
      %v804 = vsel %vm240, %v778, 0.0
      %805 = vadd.xlane.f32.xlu0 %v804
      %v806 = vpop.xlane.xlu0 %805
      %v807 = vsel %vm240, %v779, 0.0
      %808 = vadd.xlane.f32.xlu0 %v807
      %v809 = vpop.xlane.xlu0 %808
      %v810 = vsel %vm240, %v780, 0.0
      %811 = vadd.xlane.f32.xlu0 %v810
      %v812 = vpop.xlane.xlu0 %811
      %v813 = vsel %vm240, %v781, 0.0
      %814 = vadd.xlane.f32.xlu0 %v813
      %v815 = vpop.xlane.xlu0 %814
      %v816 = vsel %vm240, %v782, 0.0
      %817 = vadd.xlane.f32.xlu0 %v816
      %v818 = vpop.xlane.xlu0 %817
      %v819 = vsel %vm240, %v783, 0.0
      %820 = vadd.xlane.f32.xlu0 %v819
      %v821 = vpop.xlane.xlu0 %820
      %v822 = vsel %vm240, %v784, 0.0
      %823 = vadd.xlane.f32.xlu0 %v822
      %v824 = vpop.xlane.xlu0 %823
      %v825 = vsel %vm240, %v785, 0.0
      %826 = vadd.xlane.f32.xlu0 %v825
      %v827 = vpop.xlane.xlu0 %826
      %v828 = vsel %vm240, %v786, 0.0
      %829 = vadd.xlane.f32.xlu0 %v828
      %v830 = vpop.xlane.xlu0 %829
      %v831 = vsel %vm240, %v787, 0.0
      %832 = vadd.xlane.f32.xlu0 %v831
      %v833 = vpop.xlane.xlu0 %832
      %vm834 = vcmask 259072
      %v835 = vsel %vm834, %v788, 0.0
      %836 = vadd.xlane.f32.xlu0 %v835
      %v837 = vpop.xlane.xlu0 %836
      %v838 = vrcp.pop 32.0
      %v839 = vmul.f32 %v791, %v838
      %v840 = vmul.f32 %v794, %v838
      %v841 = vmul.f32 %v797, %v838
      %v842 = vmul.f32 %v800, %v838
      %v843 = vmul.f32 %v803, %v838
      %v844 = vmul.f32 %v806, %v838
      %v845 = vmul.f32 %v809, %v838
      %v846 = vmul.f32 %v812, %v838
      %v847 = vmul.f32 %v815, %v838
      %v848 = vmul.f32 %v818, %v838
      %v849 = vmul.f32 %v821, %v838
      %v850 = vmul.f32 %v824, %v838
      %v851 = vmul.f32 %v827, %v838
      %v852 = vmul.f32 %v830, %v838
      %v853 = vmul.f32 %v833, %v838
      %v854 = vmul.f32 %v837, %v838
      %v855 = vadd.f32 %v839, 1e-05
      %v856 = vadd.f32 %v840, 1e-05
      %v857 = vadd.f32 %v841, 1e-05
      %v858 = vadd.f32 %v842, 1e-05
      %v859 = vadd.f32 %v843, 1e-05
      %v860 = vadd.f32 %v844, 1e-05
      %v861 = vadd.f32 %v845, 1e-05
      %v862 = vadd.f32 %v846, 1e-05
      %v863 = vadd.f32 %v847, 1e-05
      %v864 = vadd.f32 %v848, 1e-05
      %v865 = vadd.f32 %v849, 1e-05
      %v866 = vadd.f32 %v850, 1e-05
      %v867 = vadd.f32 %v851, 1e-05
      %v868 = vadd.f32 %v852, 1e-05
      %v869 = vadd.f32 %v853, 1e-05
      %v870 = vadd.f32 %v854, 1e-05
      %v871 = vrsqrt.pop %v855
      %v872 = vrsqrt.pop %v856
      %v873 = vrsqrt.pop %v857
      %v874 = vrsqrt.pop %v858
      %v875 = vrsqrt.pop %v859
      %v876 = vrsqrt.pop %v860
      %v877 = vrsqrt.pop %v861
      %v878 = vrsqrt.pop %v862
      %v879 = vrsqrt.pop %v863
      %v880 = vrsqrt.pop %v864
      %v881 = vrsqrt.pop %v865
      %v882 = vrsqrt.pop %v866
      %v883 = vrsqrt.pop %v867
      %v884 = vrsqrt.pop %v868
      %v885 = vrsqrt.pop %v869
      %v886 = vrsqrt.pop %v870
      %v887 = vmul.f32 %v756, %v871
      %v888 = vmul.f32 %v757, %v872
      %v889 = vmul.f32 %v758, %v873
      %v890 = vmul.f32 %v759, %v874
      %v891 = vmul.f32 %v760, %v875
      %v892 = vmul.f32 %v761, %v876
      %v893 = vmul.f32 %v762, %v877
      %v894 = vmul.f32 %v763, %v878
      %v895 = vmul.f32 %v764, %v879
      %v896 = vmul.f32 %v765, %v880
      %v897 = vmul.f32 %v766, %v881
      %v898 = vmul.f32 %v767, %v882
      %v899 = vmul.f32 %v768, %v883
      %v900 = vmul.f32 %v769, %v884
      %v901 = vmul.f32 %v770, %v885
      %v902 = vmul.f32 %v771, %v886
      %v904 = vlaneseq
      %v905 = vshrl.u32 %v904, 7
      %v906 = vsub.s32 0, %v905
      %v907 = vrot.slane %v772, %v906
      %v909 = vmul.f32 %v887, %v907
      %v910 = vmul.f32 %v888, %v907
      %v911 = vmul.f32 %v889, %v907
      %v912 = vmul.f32 %v890, %v907
      %v913 = vmul.f32 %v891, %v907
      %v914 = vmul.f32 %v892, %v907
      %v915 = vmul.f32 %v893, %v907
      %v916 = vmul.f32 %v894, %v907
      %v917 = vmul.f32 %v895, %v907
      %v918 = vmul.f32 %v896, %v907
      %v919 = vmul.f32 %v897, %v907
      %v920 = vmul.f32 %v898, %v907
      %v921 = vmul.f32 %v899, %v907
      %v922 = vmul.f32 %v900, %v907
      %v923 = vmul.f32 %v901, %v907
      %v924 = vmul.f32 %v902, %v907
      %925 = vst.msk [vmem:[%s197] sm:$0xff] %vm240, %v909
      %926 = vst.msk [vmem:[%s197 + $0x8] sm:$0xff] %vm240, %v910
      %927 = vst.msk [vmem:[%s197 + $0x10] sm:$0xff] %vm240, %v911
      %928 = vst.msk [vmem:[%s197 + $0x18] sm:$0xff] %vm240, %v912
      %929 = vst.msk [vmem:[%s197 + $0x20] sm:$0xff] %vm240, %v913
      %930 = vst.msk [vmem:[%s197 + $0x28] sm:$0xff] %vm240, %v914
      %931 = vst.msk [vmem:[%s197 + $0x30] sm:$0xff] %vm240, %v915
      %932 = vst.msk [vmem:[%s197 + $0x38] sm:$0xff] %vm240, %v916
      %933 = vst.msk [vmem:[%s197 + $0x40] sm:$0xff] %vm240, %v917
      %934 = vst.msk [vmem:[%s197 + $0x48] sm:$0xff] %vm240, %v918
      %935 = vst.msk [vmem:[%s197 + $0x50] sm:$0xff] %vm240, %v919
      %936 = vst.msk [vmem:[%s197 + $0x58] sm:$0xff] %vm240, %v920
      %937 = vst.msk [vmem:[%s197 + $0x60] sm:$0xff] %vm240, %v921
      %938 = vst.msk [vmem:[%s197 + $0x68] sm:$0xff] %vm240, %v922
      %939 = vst.msk [vmem:[%s197 + $0x70] sm:$0xff] %vm240, %v923
      %940 = vst.msk [vmem:[%s197 + $0x78] sm:$0x3f] %vm834, %v924
      %vm941 = vcmask 254976
      %942 = vst.msk [vmem:[%s197 + $0x7e] sm:$0x3] %vm941, 0.0
      %p943 = scmp.lt.s32.totalorder %s15, 1
      %s944 = scalar_select %p943, %s15, 1
      %s945 = smul.addr %s944, 16
      %s946 = smul.addr %s945, 8
      %s947 = scalar_lea.vmem %s4, %s946
      // Predicated region
      $region37: #{tpu_custom_call.1} parent=35 // pred_check
        %p948 = pneg %p122
      $region38: #{tpu_custom_call.1} parent=35 // pred_check_branch
        %950 = sbr.rel (%p948) target = $region40
      $region39: #{tpu_custom_call.1} parent=35 // pred_region
        _
      $region40: #{tpu_custom_call.1} parent=35 // pred_fallthru
        _
    $region36: #{tpu_custom_call.1} parent=5 // pred_fallthru
      _
    %p951 = scmp.le.s32.totalorder 2, %s10
    // Predicated region
    $region41: #{tpu_custom_call.1} parent=5 // pred_check
      %p952 = pneg %p951
    $region42: #{tpu_custom_call.1} parent=5 // pred_check_branch
      %954 = sbr.rel (%p952) target = $region44
    $region43: #{tpu_custom_call.1} parent=5 // pred_region
      %s955 = ssub.s32 %s10, 2
      // Predicated region
      $region45: #{tpu_custom_call.1} parent=43 // pred_check
        %p956 = pneg %p128
      $region46: #{tpu_custom_call.1} parent=43 // pred_check_branch
        %958 = sbr.rel (%p956) target = $region48
      $region47: #{tpu_custom_call.1} parent=43 // pred_region
        %p959 = scmp.lt.s32.totalorder %s16, 1
        %s960 = scalar_select %p959, %s16, 1
        %s961 = smul.addr %s960, 16
        %s962 = smul.addr %s961, 8
        %s963 = scalar_lea.vmem %s4, %s962
      $region48: #{tpu_custom_call.1} parent=43 // pred_fallthru
        _
    $region44: #{tpu_custom_call.1} parent=5 // pred_fallthru
      _
  $region6: #{tpu_custom_call.1} parent=0 // loop_footer
    %s14 = sadd.s32 1, %s10
  $region7: #{tpu_custom_call.1} parent=0 // loop_footer_branch
    %9 = sbr.rel target = $region3
  $region8: #{tpu_custom_call.1} parent=0 // loop_exit
    _

</llo_original>
